<compile_context>
chip_gen: v7x
topology: tpu7x:2x2x1
jax: 0.10.0
libtpu: 0.0.40
codegen_flags: <defaults>
</compile_context>

<pallas_src>
import math
import functools

import jax
import jax.numpy as jnp
from jax import lax
from jax.experimental import pallas as pl
from jax.experimental.pallas import tpu as pltpu


def _attn_kernel(x_ref, wt_ref, att_ref, aw_ref, *, scaler, num_heads):
    # Block shapes:
    #   x_ref   : (1, N, C)    -- one batch element's sequence
    #   wt_ref  : (C, 3C)      -- fused QKV weight (transposed), all heads
    #   att_ref : (1, N, C)    -- att written directly in final layout
    #   aw_ref  : (1, H, N, N) -- attention weights for this batch element
    N = x_ref.shape[1]
    C = x_ref.shape[2]
    H = num_heads
    D = C // H

    x = x_ref[0]                # (N, C)
    wt = wt_ref[...]            # (C, 3C)

    # Fused QKV projection for ALL heads: one lane-dense MXU matmul.
    qkv = jnp.dot(x, wt, preferred_element_type=jnp.float32)      # (N, 3C)

    # Apply 1/sqrt(D) once to q (N*C elems) rather than per-head scores.
    q = qkv[:, 0 * C:1 * C] * scaler                               # (N, C)
    k = qkv[:, 1 * C:2 * C]                                        # (N, C)
    v = qkv[:, 2 * C:3 * C]                                        # (N, C)

    # Per-head attention, statically unrolled (H is small and static).  Each
    # head's (N, D) output slab is concatenated along lanes into an (N, C)
    # lane-dense att so a single store suffices per batch element.
    att_parts = []
    for h in range(H):
        qh = q[:, h * D:(h + 1) * D]                               # (N, D)
        kh = k[:, h * D:(h + 1) * D]                               # (N, D)
        vh = v[:, h * D:(h + 1) * D]                               # (N, D)

        # scores = qh @ kh^T without materializing a transpose of kh.
        scores = lax.dot_general(
            qh, kh,
            dimension_numbers=(((1,), (1,)), ((), ())),
            preferred_element_type=jnp.float32)                    # (N, N)

        # Numerically stable softmax (matches `scores - max` then softmax;
        # the extra max-subtraction in the module is a numerical no-op).
        m = jnp.max(scores, axis=-1, keepdims=True)
        e = jnp.exp(scores - m)
        denom = jnp.sum(e, axis=-1, keepdims=True)
        # approx=False keeps full precision so the 1e-5 tolerance holds.
        att_w = e * pl.reciprocal(denom, approx=False)             # (N, N)

        att_h = jnp.dot(att_w, vh,
                        preferred_element_type=jnp.float32)        # (N, D)

        aw_ref[0, h] = att_w.astype(aw_ref.dtype)
        att_parts.append(att_h)

    # att already in (N, C) = (N, H*D) layout -> single lane-dense store,
    # no wrapper-side transpose/reshape needed.
    att_ref[0] = jnp.concatenate(att_parts, axis=-1).astype(att_ref.dtype)


def standard_attention(hidden_state, w_qkv, num_heads):
    """Pallas implementation of StandardAttention.forward (batch_mask=None).

    hidden_state: (B, N, C) float32
    w_qkv:        (3C, C) float32  -- nn.Linear(hidden_dim, 3*hidden_dim,
                                      bias=False) weight
    Returns (att, att_weights): ((B, N, C), (B, H, N, N))
    """
    B, N, C = hidden_state.shape
    H = num_heads
    assert C % H == 0, "hidden_dim must be divisible by num_heads"
    D = C // H
    scaler = 1.0 / math.sqrt(D)

    # y = x @ W^T ; output columns laid out as (3, H, D): cols [0,C) are Q
    # (head h at cols h*D..(h+1)*D), [C,2C) are K, [2C,3C) are V.  Transpose
    # once per call (tiny) instead of per grid step inside the kernel.
    wt = w_qkv.T                                                   # (C, 3C)

    kernel = functools.partial(_attn_kernel, scaler=scaler, num_heads=H)

    att, att_weights = pl.pallas_call(
        kernel,
        out_shape=(
            jax.ShapeDtypeStruct((B, N, C), jnp.float32),
            jax.ShapeDtypeStruct((B, H, N, N), jnp.float32),
        ),
        grid_spec=pltpu.PrefetchScalarGridSpec(
            num_scalar_prefetch=0,
            grid=(B,),
            in_specs=[
                pl.BlockSpec((1, N, C), lambda b: (b, 0, 0)),
                # Constant block index -> weight DMA'd into VMEM only once.
                pl.BlockSpec((C, 3 * C), lambda b: (0, 0)),
            ],
            out_specs=[
                pl.BlockSpec((1, N, C), lambda b: (b, 0, 0)),
                pl.BlockSpec((1, H, N, N), lambda b: (b, 0, 0, 0)),
            ],
        ),
        compiler_params=pltpu.CompilerParams(
            # Batch axis is independent -> shards across the 2 TCs on v7x.
            dimension_semantics=("parallel",)),
    )(hidden_state, wt)

    return att, att_weights


def _reference(hidden_state, w_qkv, num_heads):
    B, N, C = hidden_state.shape
    H = num_heads
    D = C // H
    scaler = 1.0 / math.sqrt(D)
    wx = (hidden_state @ w_qkv.T).reshape(B, N, 3, H, D).transpose(2, 0, 3, 1, 4)
    q, k, v = wx[0], wx[1], wx[2]
    scores = jnp.einsum('bhid,bhjd->bhij', q, k) * scaler
    scores = scores - scores.max(axis=-1, keepdims=True)
    att_w = jax.nn.softmax(scores, axis=-1)
    att = jnp.einsum('bhij,bhjd->bhid', att_w, v)
    att = att.transpose(0, 2, 1, 3).reshape(B, N, C)
    return att, att_w


if __name__ == "__main__":
    B, N, C, H = 2, 8, 32, 4  # batch, seq, hidden_dim, num_heads (head_dim=8)

    key = jax.random.PRNGKey(0)
    kx, kw = jax.random.split(key)
    hidden_state = jax.random.normal(kx, (B, N, C), dtype=jnp.float32)
    # nn.Linear(hidden_dim, 3*hidden_dim, bias=False) weight: (3C, C)
    bound = 1.0 / math.sqrt(C)
    w_qkv = jax.random.uniform(kw, (3 * C, C), dtype=jnp.float32,
                               minval=-bound, maxval=bound)

    att, att_weights = standard_attention(hidden_state, w_qkv, H)
    jax.block_until_ready((att, att_weights))

    ref_att, ref_w = _reference(hidden_state, w_qkv, H)
    assert att.shape == (B, N, C)
    assert att_weights.shape == (B, H, N, N)
    assert jnp.allclose(att, ref_att, atol=1e-5, rtol=1e-5)
    assert jnp.allclose(att_weights, ref_w, atol=1e-5, rtol=1e-5)

    print("KERNEL_OK")
</pallas_src>

<mosaic_0001>
module attributes {stable_mosaic.version = 11 : i64} {
  func.func @_attn_kernel(%arg0: i32, %arg1: memref<1x8x32xf32, #tpu.memory_space<vmem>>, %arg2: memref<32x96xf32, #tpu.memory_space<vmem>>, %arg3: memref<1x8x32xf32, #tpu.memory_space<vmem>>, %arg4: memref<1x4x8x8xf32, #tpu.memory_space<vmem>>) attributes {dimension_semantics = [#tpu.dimension_semantics<parallel>], iteration_bounds = array<i64: 2>, scalar_prefetch = 0 : i64, scratch_operands = 0 : i64, tpu.core_type = #tpu.core_type<tc>, window_params = [{transform_indices = @transform_0, window_bounds = array<i64: 1, 8, 32>}, {pipeline_mode = #tpu.pipeline_mode<synchronous>, transform_indices = @transform_1, window_bounds = array<i64: 32, 96>}, {transform_indices = @transform_2, window_bounds = array<i64: 1, 8, 32>}, {transform_indices = @transform_3, window_bounds = array<i64: 1, 4, 8, 8>}]} {
    %c0 = arith.constant 0 : index
    %c0_0 = arith.constant 0 : index
    %c0_1 = arith.constant 0 : index
    %0 = vector.load %arg1[%c0, %c0_0, %c0_1] : memref<1x8x32xf32, #tpu.memory_space<vmem>>, vector<1x8x32xf32>
    %1 = vector.shape_cast %0 : vector<1x8x32xf32> to vector<8x32xf32>
    %c0_2 = arith.constant 0 : index
    %c0_3 = arith.constant 0 : index
    %2 = vector.load %arg2[%c0_2, %c0_3] : memref<32x96xf32, #tpu.memory_space<vmem>>, vector<32x96xf32>
    %cst = arith.constant dense<0.000000e+00> : vector<8x96xf32>
    %3 = tpu.matmul %1, %2, %cst {dimension_numbers = #tpu.dot_dimension_numbers<[1], [0], [0], [1], [0, 0, 1, 1], [], []>} : vector<8x32xf32>, vector<32x96xf32>, vector<8x96xf32> -> vector<8x96xf32>
    %4 = vector.extract_strided_slice %3 {offsets = [0, 0], sizes = [8, 32], strides = [1, 1]} : vector<8x96xf32> to vector<8x32xf32>
    %cst_4 = arith.constant 0.353553385 : f32
    %5 = vector.broadcast %cst_4 : f32 to vector<8x32xf32>
    %6 = arith.mulf %4, %5 : vector<8x32xf32>
    %7 = vector.extract_strided_slice %3 {offsets = [0, 32], sizes = [8, 32], strides = [1, 1]} : vector<8x96xf32> to vector<8x32xf32>
    %8 = vector.extract_strided_slice %3 {offsets = [0, 64], sizes = [8, 32], strides = [1, 1]} : vector<8x96xf32> to vector<8x32xf32>
    %9 = vector.extract_strided_slice %6 {offsets = [0, 0], sizes = [8, 8], strides = [1, 1]} : vector<8x32xf32> to vector<8x8xf32>
    %10 = vector.extract_strided_slice %7 {offsets = [0, 0], sizes = [8, 8], strides = [1, 1]} : vector<8x32xf32> to vector<8x8xf32>
    %11 = vector.extract_strided_slice %8 {offsets = [0, 0], sizes = [8, 8], strides = [1, 1]} : vector<8x32xf32> to vector<8x8xf32>
    %cst_5 = arith.constant dense<0.000000e+00> : vector<8x8xf32>
    %12 = tpu.matmul %9, %10, %cst_5 {dimension_numbers = #tpu.dot_dimension_numbers<[1], [1], [0], [0], [0, 0, 1, 0], [], []>} : vector<8x8xf32>, vector<8x8xf32>, vector<8x8xf32> -> vector<8x8xf32>
    %cst_6 = arith.constant dense<0xFF800000> : vector<8xf32>
    %13 = vector.multi_reduction <maximumf>, %12, %cst_6 [1] : vector<8x8xf32> to vector<8xf32>
    %14 = vector.shape_cast %13 : vector<8xf32> to vector<8x1xf32>
    %15 = vector.broadcast %14 : vector<8x1xf32> to vector<8x8xf32>
    %16 = arith.subf %12, %15 : vector<8x8xf32>
    %17 = math.exp %16 : vector<8x8xf32>
    %cst_7 = arith.constant dense<0.000000e+00> : vector<8xf32>
    %18 = vector.multi_reduction <add>, %17, %cst_7 [1] : vector<8x8xf32> to vector<8xf32>
    %19 = vector.shape_cast %18 : vector<8xf32> to vector<8x1xf32>
    %20 = tpu.reciprocal %19 : vector<8x1xf32> -> vector<8x1xf32>
    %21 = vector.broadcast %20 : vector<8x1xf32> to vector<8x8xf32>
    %22 = arith.mulf %17, %21 : vector<8x8xf32>
    %cst_8 = arith.constant dense<0.000000e+00> : vector<8x8xf32>
    %23 = tpu.matmul %22, %11, %cst_8 {dimension_numbers = #tpu.dot_dimension_numbers<[1], [0], [0], [1], [0, 0, 1, 1], [], []>} : vector<8x8xf32>, vector<8x8xf32>, vector<8x8xf32> -> vector<8x8xf32>
    %c0_9 = arith.constant 0 : index
    %c0_10 = arith.constant 0 : index
    %c0_11 = arith.constant 0 : index
    %c0_12 = arith.constant 0 : index
    %24 = vector.load %arg4[%c0_9, %c0_10, %c0_11, %c0_12] : memref<1x4x8x8xf32, #tpu.memory_space<vmem>>, vector<1x1x8x8xf32>
    %25 = vector.shape_cast %24 : vector<1x1x8x8xf32> to vector<8x8xf32>
    %26 = vector.shape_cast %22 : vector<8x8xf32> to vector<1x1x8x8xf32>
    tpu.vector_store %arg4[%c0_9, %c0_10, %c0_11, %c0_12], %26 {strides = array<i32>} : memref<1x4x8x8xf32, #tpu.memory_space<vmem>>, vector<1x1x8x8xf32>,
    %27 = vector.extract_strided_slice %6 {offsets = [0, 8], sizes = [8, 8], strides = [1, 1]} : vector<8x32xf32> to vector<8x8xf32>
    %28 = vector.extract_strided_slice %7 {offsets = [0, 8], sizes = [8, 8], strides = [1, 1]} : vector<8x32xf32> to vector<8x8xf32>
    %29 = vector.extract_strided_slice %8 {offsets = [0, 8], sizes = [8, 8], strides = [1, 1]} : vector<8x32xf32> to vector<8x8xf32>
    %cst_13 = arith.constant dense<0.000000e+00> : vector<8x8xf32>
    %30 = tpu.matmul %27, %28, %cst_13 {dimension_numbers = #tpu.dot_dimension_numbers<[1], [1], [0], [0], [0, 0, 1, 0], [], []>} : vector<8x8xf32>, vector<8x8xf32>, vector<8x8xf32> -> vector<8x8xf32>
    %cst_14 = arith.constant dense<0xFF800000> : vector<8xf32>
    %31 = vector.multi_reduction <maximumf>, %30, %cst_14 [1] : vector<8x8xf32> to vector<8xf32>
    %32 = vector.shape_cast %31 : vector<8xf32> to vector<8x1xf32>
    %33 = vector.broadcast %32 : vector<8x1xf32> to vector<8x8xf32>
    %34 = arith.subf %30, %33 : vector<8x8xf32>
    %35 = math.exp %34 : vector<8x8xf32>
    %cst_15 = arith.constant dense<0.000000e+00> : vector<8xf32>
    %36 = vector.multi_reduction <add>, %35, %cst_15 [1] : vector<8x8xf32> to vector<8xf32>
    %37 = vector.shape_cast %36 : vector<8xf32> to vector<8x1xf32>
    %38 = tpu.reciprocal %37 : vector<8x1xf32> -> vector<8x1xf32>
    %39 = vector.broadcast %38 : vector<8x1xf32> to vector<8x8xf32>
    %40 = arith.mulf %35, %39 : vector<8x8xf32>
    %cst_16 = arith.constant dense<0.000000e+00> : vector<8x8xf32>
    %41 = tpu.matmul %40, %29, %cst_16 {dimension_numbers = #tpu.dot_dimension_numbers<[1], [0], [0], [1], [0, 0, 1, 1], [], []>} : vector<8x8xf32>, vector<8x8xf32>, vector<8x8xf32> -> vector<8x8xf32>
    %c0_17 = arith.constant 0 : index
    %c1 = arith.constant 1 : index
    %c0_18 = arith.constant 0 : index
    %c0_19 = arith.constant 0 : index
    %42 = vector.load %arg4[%c0_17, %c1, %c0_18, %c0_19] : memref<1x4x8x8xf32, #tpu.memory_space<vmem>>, vector<1x1x8x8xf32>
    %43 = vector.shape_cast %42 : vector<1x1x8x8xf32> to vector<8x8xf32>
    %44 = vector.shape_cast %40 : vector<8x8xf32> to vector<1x1x8x8xf32>
    tpu.vector_store %arg4[%c0_17, %c1, %c0_18, %c0_19], %44 {strides = array<i32>} : memref<1x4x8x8xf32, #tpu.memory_space<vmem>>, vector<1x1x8x8xf32>,
    %45 = vector.extract_strided_slice %6 {offsets = [0, 16], sizes = [8, 8], strides = [1, 1]} : vector<8x32xf32> to vector<8x8xf32>
    %46 = vector.extract_strided_slice %7 {offsets = [0, 16], sizes = [8, 8], strides = [1, 1]} : vector<8x32xf32> to vector<8x8xf32>
    %47 = vector.extract_strided_slice %8 {offsets = [0, 16], sizes = [8, 8], strides = [1, 1]} : vector<8x32xf32> to vector<8x8xf32>
    %cst_20 = arith.constant dense<0.000000e+00> : vector<8x8xf32>
    %48 = tpu.matmul %45, %46, %cst_20 {dimension_numbers = #tpu.dot_dimension_numbers<[1], [1], [0], [0], [0, 0, 1, 0], [], []>} : vector<8x8xf32>, vector<8x8xf32>, vector<8x8xf32> -> vector<8x8xf32>
    %cst_21 = arith.constant dense<0xFF800000> : vector<8xf32>
    %49 = vector.multi_reduction <maximumf>, %48, %cst_21 [1] : vector<8x8xf32> to vector<8xf32>
    %50 = vector.shape_cast %49 : vector<8xf32> to vector<8x1xf32>
    %51 = vector.broadcast %50 : vector<8x1xf32> to vector<8x8xf32>
    %52 = arith.subf %48, %51 : vector<8x8xf32>
    %53 = math.exp %52 : vector<8x8xf32>
    %cst_22 = arith.constant dense<0.000000e+00> : vector<8xf32>
    %54 = vector.multi_reduction <add>, %53, %cst_22 [1] : vector<8x8xf32> to vector<8xf32>
    %55 = vector.shape_cast %54 : vector<8xf32> to vector<8x1xf32>
    %56 = tpu.reciprocal %55 : vector<8x1xf32> -> vector<8x1xf32>
    %57 = vector.broadcast %56 : vector<8x1xf32> to vector<8x8xf32>
    %58 = arith.mulf %53, %57 : vector<8x8xf32>
    %cst_23 = arith.constant dense<0.000000e+00> : vector<8x8xf32>
    %59 = tpu.matmul %58, %47, %cst_23 {dimension_numbers = #tpu.dot_dimension_numbers<[1], [0], [0], [1], [0, 0, 1, 1], [], []>} : vector<8x8xf32>, vector<8x8xf32>, vector<8x8xf32> -> vector<8x8xf32>
    %c0_24 = arith.constant 0 : index
    %c2 = arith.constant 2 : index
    %c0_25 = arith.constant 0 : index
    %c0_26 = arith.constant 0 : index
    %60 = vector.load %arg4[%c0_24, %c2, %c0_25, %c0_26] : memref<1x4x8x8xf32, #tpu.memory_space<vmem>>, vector<1x1x8x8xf32>
    %61 = vector.shape_cast %60 : vector<1x1x8x8xf32> to vector<8x8xf32>
    %62 = vector.shape_cast %58 : vector<8x8xf32> to vector<1x1x8x8xf32>
    tpu.vector_store %arg4[%c0_24, %c2, %c0_25, %c0_26], %62 {strides = array<i32>} : memref<1x4x8x8xf32, #tpu.memory_space<vmem>>, vector<1x1x8x8xf32>,
    %63 = vector.extract_strided_slice %6 {offsets = [0, 24], sizes = [8, 8], strides = [1, 1]} : vector<8x32xf32> to vector<8x8xf32>
    %64 = vector.extract_strided_slice %7 {offsets = [0, 24], sizes = [8, 8], strides = [1, 1]} : vector<8x32xf32> to vector<8x8xf32>
    %65 = vector.extract_strided_slice %8 {offsets = [0, 24], sizes = [8, 8], strides = [1, 1]} : vector<8x32xf32> to vector<8x8xf32>
    %cst_27 = arith.constant dense<0.000000e+00> : vector<8x8xf32>
    %66 = tpu.matmul %63, %64, %cst_27 {dimension_numbers = #tpu.dot_dimension_numbers<[1], [1], [0], [0], [0, 0, 1, 0], [], []>} : vector<8x8xf32>, vector<8x8xf32>, vector<8x8xf32> -> vector<8x8xf32>
    %cst_28 = arith.constant dense<0xFF800000> : vector<8xf32>
    %67 = vector.multi_reduction <maximumf>, %66, %cst_28 [1] : vector<8x8xf32> to vector<8xf32>
    %68 = vector.shape_cast %67 : vector<8xf32> to vector<8x1xf32>
    %69 = vector.broadcast %68 : vector<8x1xf32> to vector<8x8xf32>
    %70 = arith.subf %66, %69 : vector<8x8xf32>
    %71 = math.exp %70 : vector<8x8xf32>
    %cst_29 = arith.constant dense<0.000000e+00> : vector<8xf32>
    %72 = vector.multi_reduction <add>, %71, %cst_29 [1] : vector<8x8xf32> to vector<8xf32>
    %73 = vector.shape_cast %72 : vector<8xf32> to vector<8x1xf32>
    %74 = tpu.reciprocal %73 : vector<8x1xf32> -> vector<8x1xf32>
    %75 = vector.broadcast %74 : vector<8x1xf32> to vector<8x8xf32>
    %76 = arith.mulf %71, %75 : vector<8x8xf32>
    %cst_30 = arith.constant dense<0.000000e+00> : vector<8x8xf32>
    %77 = tpu.matmul %76, %65, %cst_30 {dimension_numbers = #tpu.dot_dimension_numbers<[1], [0], [0], [1], [0, 0, 1, 1], [], []>} : vector<8x8xf32>, vector<8x8xf32>, vector<8x8xf32> -> vector<8x8xf32>
    %c0_31 = arith.constant 0 : index
    %c3 = arith.constant 3 : index
    %c0_32 = arith.constant 0 : index
    %c0_33 = arith.constant 0 : index
    %78 = vector.load %arg4[%c0_31, %c3, %c0_32, %c0_33] : memref<1x4x8x8xf32, #tpu.memory_space<vmem>>, vector<1x1x8x8xf32>
    %79 = vector.shape_cast %78 : vector<1x1x8x8xf32> to vector<8x8xf32>
    %80 = vector.shape_cast %76 : vector<8x8xf32> to vector<1x1x8x8xf32>
    tpu.vector_store %arg4[%c0_31, %c3, %c0_32, %c0_33], %80 {strides = array<i32>} : memref<1x4x8x8xf32, #tpu.memory_space<vmem>>, vector<1x1x8x8xf32>,
    %81 = tpu.concatenate %23, %41, %59, %77 in 1 : vector<8x8xf32>, vector<8x8xf32>, vector<8x8xf32>, vector<8x8xf32> -> vector<8x32xf32>
    %c0_34 = arith.constant 0 : index
    %c0_35 = arith.constant 0 : index
    %c0_36 = arith.constant 0 : index
    %82 = vector.load %arg3[%c0_34, %c0_35, %c0_36] : memref<1x8x32xf32, #tpu.memory_space<vmem>>, vector<1x8x32xf32>
    %83 = vector.shape_cast %82 : vector<1x8x32xf32> to vector<8x32xf32>
    %84 = vector.shape_cast %81 : vector<8x32xf32> to vector<1x8x32xf32>
    tpu.vector_store %arg3[%c0_34, %c0_35, %c0_36], %84 {strides = array<i32>} : memref<1x8x32xf32, #tpu.memory_space<vmem>>, vector<1x8x32xf32>,
    return
  }
  func.func @transform_0(%arg0: i32) -> (i32, i32, i32) {
    %c0_i32 = arith.constant 0 : i32
    %c0_i32_0 = arith.constant 0 : i32
    %c0_i32_1 = arith.constant 0 : i32
    return %arg0, %c0_i32, %c0_i32_0 : i32, i32, i32
  }
  func.func @transform_1(%arg0: i32) -> (i32, i32) {
    %c0_i32 = arith.constant 0 : i32
    %c0_i32_0 = arith.constant 0 : i32
    %c0_i32_1 = arith.constant 0 : i32
    return %c0_i32, %c0_i32_0 : i32, i32
  }
  func.func @transform_2(%arg0: i32) -> (i32, i32, i32) {
    %c0_i32 = arith.constant 0 : i32
    %c0_i32_0 = arith.constant 0 : i32
    %c0_i32_1 = arith.constant 0 : i32
    return %arg0, %c0_i32, %c0_i32_0 : i32, i32, i32
  }
  func.func @transform_3(%arg0: i32) -> (i32, i32, i32, i32) {
    %c0_i32 = arith.constant 0 : i32
    %c0_i32_0 = arith.constant 0 : i32
    %c0_i32_1 = arith.constant 0 : i32
    %c0_i32_2 = arith.constant 0 : i32
    return %arg0, %c0_i32, %c0_i32_0, %c0_i32_1 : i32, i32, i32, i32
  }
}

</mosaic_0001>

<llo_original>
// kernel: tpu_custom_call.1
$region0: #{tpu_custom_call.1}
  #allocation0 [shape = 'u32[]', space=smem, size = 0x4, offset = 0x4, fixed_abs, tag = 'smem constant byte address 0x4 - core index']
  #allocation1 [shape = 'u32[144,128]{1,0:T(1,128)}', space=vmem, size = 0x12000, scoped, tag = 'internal scratch']
  %s0 = inlined_call_operand.hbm [shape: f32[2,8,32], index: 0, kind: input, shape index: {}]
  %s1 = inlined_call_operand.hbm [shape: f32[32,96], index: 1, kind: input, shape index: {}]
  %s2 = inlined_call_operand.hbm [shape: f32[2,8,32], index: 2, kind: output, shape index: {0}]
  %s3 = inlined_call_operand.hbm [shape: f32[2,4,8,8], index: 3, kind: output, shape index: {1}]
  %4 = xla_tuple %s2, %s3
  %s5 = sld [smem:[#allocation0]]
  $region57: #{tpu_custom_call.1} parent=0
    _
  %s7 = ssub.s32 1, %s5
  %s8 = scalar_select 0, %s7, %s5
  $region1: #{tpu_custom_call.1} parent=0
    #allocation2 [shape = 'u8[8192]{0}', space=vmem, size = 0x2000, scoped, tag = 'input window, operand 0']
    #allocation3 [shape = 's32[2]{0}', space=sflag, size = 0x8, scoped, tag = 'scoped memory for tpu_custom_call.1']
    #allocation4 [shape = 's32[2]{0}', space=sflag, size = 0x8, scoped, tag = 'scoped memory for tpu_custom_call.1']
    #allocation5 [shape = 'u8[16384]{0}', space=vmem, size = 0x4000, scoped, tag = 'input window, operand 1, single buffered']
    #allocation6 [shape = 's32[1]{0}', space=sflag, size = 0x4, scoped, tag = 'scoped memory for tpu_custom_call.1']
    #allocation7 [shape = 'u8[8192]{0}', space=vmem, size = 0x2000, scoped, tag = 'output window, operand 0']
    #allocation8 [shape = 'u8[32768]{0}', space=vmem, size = 0x8000, scoped, tag = 'output window, operand 1']
    #allocation9 [shape = 's32[2]{0}', space=sflag, size = 0x8, scoped, tag = 'scoped memory for tpu_custom_call.1']
    %9 = vsyncpa [#allocation3], 0
    %s10 = scalar_lea.sflag [#allocation3], 1
    %11 = vsyncpa %s10, 0
    %12 = vsyncpa [#allocation6], 0
    %13 = vsyncpa [#allocation4], 0
    %s14 = scalar_lea.sflag [#allocation4], 1
    %15 = vsyncpa %s14, 0
    %16 = vsyncpa [#allocation9], 0
    %s17 = scalar_lea.sflag [#allocation9], 1
    %18 = vsyncpa %s17, 0
    loop: start=0, step=1, limit=4
    $region2: #{tpu_custom_call.1} parent=1 // loop_pre_header
      _
    $region3: #{tpu_custom_call.1} parent=1 // loop_header
      %s20 = sphi 0, %s24
      %p21 = scmp.ge.s32.totalorder %s20, 4
      %s30 = sphi 0, %s32
      %s33 = sphi 0, %s30
      %s34 = sphi 0, %s33
      %s50 = sphi 0, %s34
      %s54 = sphi 0, %s54
      %s56 = sphi 0, %s54
      %s57 = sphi 0, %s56
      %s71 = sphi 0, %s57
      %s77 = sphi 0, %s79
      %s80 = sphi 0, %s77
      %s81 = sphi 0, %s80
      %s97 = sphi 0, %s81
      %s103 = sphi 0, %s105
      %s106 = sphi 0, %s103
      %s107 = sphi 0, %s106
      %s123 = sphi 0, %s107
    $region4: #{tpu_custom_call.1} parent=1 // loop_header_branch
      %23 = sbr.rel (%p21) target = $region8
    $region5: #{tpu_custom_call.1} parent=1 // loop_body
      %s25 = ssub.s32 %s20, 1
      %s26 = ssub.s32 %s20, 2
      %s27 = sadd.s32 %s20, 1
      %s28 = ssub.s32 %s20, %s27
      %p29 = scmp.eq.s32.totalorder %s28, 0
      %s31 = sadd.s32 %s30, 1
      %s32 = scalar_select %p29, %s30, %s31
      %p35 = pneg %p29
      %p36 = scmp.eq.s32.totalorder %s20, 1
      %p37 = por %p35, %p36
      %p38 = scmp.ne.s32.totalorder %s30, %s33
      %p39 = scmp.eq.s32.totalorder %s20, 0
      %p40 = por %p38, %p39
      %p41 = scmp.ne.s32.totalorder %s30, %s33
      %p42 = scmp.eq.s32.totalorder %s25, 1
      %p43 = por %p41, %p42
      %p44 = scmp.ne.s32.totalorder %s33, %s34
      %p45 = scmp.eq.s32.totalorder %s25, 0
      %p46 = por %p44, %p45
      %p47 = scmp.ne.s32.totalorder %s33, %s34
      %p48 = scmp.eq.s32.totalorder %s26, 1
      %p49 = por %p47, %p48
      %p51 = scmp.ne.s32.totalorder %s34, %s50
      %p52 = scmp.eq.s32.totalorder %s26, 0
      %p53 = por %p51, %p52
      %s55 = sadd.s32 %s54, 1
      %p58 = scmp.eq.s32.totalorder %s20, 1
      %p59 = scmp.ne.s32.totalorder %s54, %s56
      %p60 = scmp.eq.s32.totalorder %s20, 0
      %p61 = por %p59, %p60
      %p62 = scmp.ne.s32.totalorder %s54, %s56
      %p63 = scmp.eq.s32.totalorder %s25, 1
      %p64 = por %p62, %p63
      %p65 = scmp.ne.s32.totalorder %s56, %s57
      %p66 = scmp.eq.s32.totalorder %s25, 0
      %p67 = por %p65, %p66
      %p68 = scmp.ne.s32.totalorder %s56, %s57
      %p69 = scmp.eq.s32.totalorder %s26, 1
      %p70 = por %p68, %p69
      %p72 = scmp.ne.s32.totalorder %s57, %s71
      %p73 = scmp.eq.s32.totalorder %s26, 0
      %p74 = por %p72, %p73
      %s75 = ssub.s32 %s20, %s27
      %p76 = scmp.eq.s32.totalorder %s75, 0
      %s78 = sadd.s32 %s77, 1
      %s79 = scalar_select %p76, %s77, %s78
      %p82 = pneg %p76
      %p83 = scmp.eq.s32.totalorder %s20, 1
      %p84 = por %p82, %p83
      %p85 = scmp.ne.s32.totalorder %s77, %s80
      %p86 = scmp.eq.s32.totalorder %s20, 0
      %p87 = por %p85, %p86
      %p88 = scmp.ne.s32.totalorder %s77, %s80
      %p89 = scmp.eq.s32.totalorder %s25, 1
      %p90 = por %p88, %p89
      %p91 = scmp.ne.s32.totalorder %s80, %s81
      %p92 = scmp.eq.s32.totalorder %s25, 0
      %p93 = por %p91, %p92
      %p94 = scmp.ne.s32.totalorder %s80, %s81
      %p95 = scmp.eq.s32.totalorder %s26, 1
      %p96 = por %p94, %p95
      %p98 = scmp.ne.s32.totalorder %s81, %s97
      %p99 = scmp.eq.s32.totalorder %s26, 0
      %p100 = por %p98, %p99
      %s101 = ssub.s32 %s20, %s27
      %p102 = scmp.eq.s32.totalorder %s101, 0
      %s104 = sadd.s32 %s103, 1
      %s105 = scalar_select %p102, %s103, %s104
      %p108 = pneg %p102
      %p109 = scmp.eq.s32.totalorder %s20, 1
      %p110 = por %p108, %p109
      %p111 = scmp.ne.s32.totalorder %s103, %s106
      %p112 = scmp.eq.s32.totalorder %s20, 0
      %p113 = por %p111, %p112
      %p114 = scmp.ne.s32.totalorder %s103, %s106
      %p115 = scmp.eq.s32.totalorder %s25, 1
      %p116 = por %p114, %p115
      %p117 = scmp.ne.s32.totalorder %s106, %s107
      %p118 = scmp.eq.s32.totalorder %s25, 0
      %p119 = por %p117, %p118
      %p120 = scmp.ne.s32.totalorder %s106, %s107
      %p121 = scmp.eq.s32.totalorder %s26, 1
      %p122 = por %p120, %p121
      %p124 = scmp.ne.s32.totalorder %s107, %s123
      %p125 = scmp.eq.s32.totalorder %s26, 0
      %p126 = por %p124, %p125
      %p127 = scmp.le.s32.totalorder 1, %s20
      %p128 = scmp.lt.s32.totalorder %s20, 3
      %p129 = pnand %p127, %p128
      %p130 = pneg %p129
      // Predicated region
      $region9: #{tpu_custom_call.1} parent=5 // pred_check
        _
      $region10: #{tpu_custom_call.1} parent=5 // pred_check_branch
        %132 = sbr.rel (%p129) target = $region12
      $region11: #{tpu_custom_call.1} parent=5 // pred_region
        %s133 = ssub.s32 %s20, 1
        // Predicated region
        $region13: #{tpu_custom_call.1} parent=11 // pred_check
          %p134 = pneg %p67
        $region14: #{tpu_custom_call.1} parent=11 // pred_check_branch
          %136 = sbr.rel (%p134) target = $region16
        $region15: #{tpu_custom_call.1} parent=11 // pred_region
          %s138 = ssub.s32 512, 512
          %139 = vsyncadd [#allocation6], %s138
          %s140 = sshll.u32 [#allocation5], 4
          %s141 = int_to_ptr.vmem [resolvable:$true] %s140
          %146 = dma.hbm_to_vmem [thread:$0]  %s1, 512, %s141, [#allocation6], 128, 128, 8
        $region16: #{tpu_custom_call.1} parent=11 // pred_fallthru
          _
      $region12: #{tpu_custom_call.1} parent=5 // pred_fallthru
        _
      %p147 = scmp.lt.s32.totalorder %s20, 2
      // Predicated region
      $region17: #{tpu_custom_call.1} parent=5 // pred_check
        %p148 = pneg %p147
      $region18: #{tpu_custom_call.1} parent=5 // pred_check_branch
        %150 = sbr.rel (%p148) target = $region20
      $region19: #{tpu_custom_call.1} parent=5 // pred_region
        // Predicated region
        $region21: #{tpu_custom_call.1} parent=19 // pred_check
          %p151 = pneg %p40
        $region22: #{tpu_custom_call.1} parent=19 // pred_check_branch
          %153 = sbr.rel (%p151) target = $region24
        $region23: #{tpu_custom_call.1} parent=19 // pred_region
          %s154 = sand.u32 %s30, 1
          %s155 = scalar_lea.sflag [#allocation3], %s154
          %s156 = sand.u32 %s30, 1
          %s157 = smul.addr %s156, 8
          %s158 = scalar_lea.vmem [#allocation2], %s157
          %s160 = ssub.s32 128, 128
          %161 = vsyncadd %s155, %s160
          %s162 = smul.addr %s20, 128
          %s163 = scalar_lea.hbm %s0, %s162
          %s165 = sshll.u32 %s158, 4
          %s166 = int_to_ptr.vmem [resolvable:$true] %s165
          %168 = dma.hbm_to_vmem [thread:$0]  %s163, 128, %s166, %s155
        $region24: #{tpu_custom_call.1} parent=19 // pred_fallthru
          _
      $region20: #{tpu_custom_call.1} parent=5 // pred_fallthru
        _
      %p169 = scmp.le.s32.totalorder 1, %s20
      %p170 = scmp.lt.s32.totalorder %s20, 3
      %p171 = pnand %p169, %p170
      %p172 = pneg %p171
      // Predicated region
      $region25: #{tpu_custom_call.1} parent=5 // pred_check
        _
      $region26: #{tpu_custom_call.1} parent=5 // pred_check_branch
        %174 = sbr.rel (%p171) target = $region28
      $region27: #{tpu_custom_call.1} parent=5 // pred_region
        %s175 = ssub.s32 %s20, 1
        %s176 = sand.u32 %s33, 1
        %s177 = scalar_lea.sflag [#allocation3], %s176
        %s178 = sand.u32 %s33, 1
        %s179 = smul.addr %s178, 8
        %s180 = scalar_lea.vmem [#allocation2], %s179
        // Predicated region
        $region29: #{tpu_custom_call.1} parent=27 // pred_check
          %p181 = pneg %p46
        $region30: #{tpu_custom_call.1} parent=27 // pred_check_branch
          %183 = sbr.rel (%p181) target = $region32
        $region31: #{tpu_custom_call.1} parent=27 // pred_region
          %184 = dma.done %s177, 128
        $region32: #{tpu_custom_call.1} parent=27 // pred_fallthru
          _
        // Predicated region
        $region33: #{tpu_custom_call.1} parent=27 // pred_check
          %p185 = pneg %p67
        $region34: #{tpu_custom_call.1} parent=27 // pred_check_branch
          %187 = sbr.rel (%p185) target = $region36
        $region35: #{tpu_custom_call.1} parent=27 // pred_region
          %188 = dma.done [#allocation6], 512
        $region36: #{tpu_custom_call.1} parent=27 // pred_fallthru
          _
        %s189 = sand.u32 %s33, 1
        %s190 = scalar_lea.sflag [#allocation3], %s189
        %s191 = sand.u32 %s33, 1
        %s192 = smul.addr %s191, 8
        %s193 = scalar_lea.vmem [#allocation2], %s192
        %p194 = pneg %p46
        %p195 = pneg %p43
        %p196 = pneg %p67
        %p197 = pneg %p64
        %p198 = pneg %p93
        %p199 = pneg %p90
        %s200 = sand.u32 %s80, 1
        %s201 = scalar_lea.sflag [#allocation4], %s200
        %s202 = sand.u32 %s80, 1
        %s203 = smul.addr %s202, 8
        %s204 = scalar_lea.vmem [#allocation7], %s203
        %p205 = pneg %p119
        %p206 = pneg %p116
        %s207 = sand.u32 %s106, 1
        %s208 = scalar_lea.sflag [#allocation9], %s207
        %s209 = sand.u32 %s106, 1
        %s210 = smul.addr %s209, 32
        %s211 = scalar_lea.vmem [#allocation8], %s210
        %v212 = vld [vmem:[%s180] sm:$0xff]
        %v213 = vld [vmem:[#allocation5] sm:$0xff]
        %v214 = vld [vmem:[#allocation5 + $0x8] sm:$0xff]
        %v215 = vld [vmem:[#allocation5 + $0x10] sm:$0xff]
        %v216 = vld [vmem:[#allocation5 + $0x18] sm:$0xff]
        %vm217 = vcmask 261120
        %v219 = vsel %vm217, %v212, 0
        %221 = vmatprep.subr.mxu0 0.0
        %222 = vmatpush1.msra.mxu0 %v213
        %223 = vmatprep.subr.mxu0 0.0
        %224 = vmatpush1.msra.mxu0 %v214
        %225 = vmatprep.subr.mxu0 0.0
        %226 = vmatpush1.msra.mxu0 %v215
        %227 = vmatprep.subr.mxu0 0.0
        %228 = vmatpush1.msra.mxu0 %v216
        %229 = vmatprep.subr.mxu0 0.0
        %230 = vmatpush1.msra.mxu0 0.0
        %231 = vmatprep.subr.mxu0 0.0
        %232 = vmatpush1.msra.mxu0 0.0
        %233 = vmatprep.subr.mxu0 0.0
        %234 = vmatpush1.msra.mxu0 0.0
        %235 = vmatprep.subr.mxu0 0.0
        %236 = vmatpush1.msra.mxu0 0.0
        %237 = vmatprep.subr.mxu0 0.0
        %238 = vmatpush1.msra.mxu0 0.0
        %239 = vmatprep.subr.mxu0 0.0
        %240 = vmatpush1.msra.mxu0 0.0
        %241 = vmatprep.subr.mxu0 0.0
        %242 = vmatpush1.msra.mxu0 0.0
        %243 = vmatprep.subr.mxu0 0.0
        %244 = vmatpush1.msra.mxu0 0.0
        %245 = vmatprep.subr.mxu0 0.0
        %246 = vmatpush1.msra.mxu0 0.0
        %247 = vmatprep.subr.mxu0 0.0
        %248 = vmatpush1.msra.mxu0 0.0
        %249 = vmatprep.subr.mxu0 0.0
        %250 = vmatpush1.msra.mxu0 0.0
        %251 = vmatprep.subr.mxu0 0.0
        %252 = vmatpush1.msra.mxu0 0.0
        %253 = vmatprep.subr.mxu0 0.0
        %254 = vmatpush1.msra.mxu0 0.0
        %255 = vmatprep.subr.mxu0 0.0
        %256 = vmatpush1.msra.mxu0 0.0
        %257 = vmatprep.subr.mxu0 0.0
        %258 = vmatpush1.msra.mxu0 0.0
        %259 = vmatprep.subr.mxu0 0.0
        %260 = vmatpush1.msra.mxu0 0.0
        %261 = vmatprep.subr.mxu0 0.0
        %262 = vmatpush1.msra.mxu0 0.0
        %263 = vmatprep.subr.mxu0 0.0
        %264 = vmatpush1.msra.mxu0 0.0
        %265 = vmatprep.subr.mxu0 0.0
        %266 = vmatpush1.msra.mxu0 0.0
        %267 = vmatprep.subr.mxu0 0.0
        %268 = vmatpush1.msra.mxu0 0.0
        %269 = vmatprep.subr.mxu0 0.0
        %270 = vmatpush1.msra.mxu0 0.0
        %271 = vmatprep.subr.mxu0 0.0
        %272 = vmatpush1.msra.mxu0 0.0
        %273 = vmatprep.subr.mxu0 0.0
        %274 = vmatpush1.msra.mxu0 0.0
        %275 = vmatprep.subr.mxu0 0.0
        %276 = vmatpush1.msra.mxu0 0.0
        %277 = vmatprep.subr.mxu0 0.0
        %278 = vmatpush1.msra.mxu0 0.0
        %279 = vmatprep.subr.mxu0 0.0
        %280 = vmatpush1.msra.mxu0 0.0
        %281 = vmatprep.subr.mxu0 0.0
        %282 = vmatpush1.msra.mxu0 0.0
        %283 = vmatprep.subr.mxu0 0.0
        %284 = vmatpush1.msra.mxu0 0.0
        %285 = vmatprep.mubr.f32.mxu0 0.0
        %286 = vmatmul.mubr.f32.gmra.mrb[0].mxu0 %v219
        %v287 = vpop.f32.mrb[0].mxu0
        %v288 = vadd.f32 0.0, %v287
        %v289 = vpop.f32.mrb[0].mxu0
        %290 = vdwg.mxu0
        %v291 = vmul.f32 %v288, 0.35355338
        %293 = vrot.lane.b32.xlu0 %v288, 96
        %v294 = vpop.permute.xlu0 %293
        %vm295 = vcmask 64512
        %v297 = vsel %vm295, %v291, 0
        %v299 = vsel %vm295, %v294, 0
        %301 = vmatprep.subr.mxu0 0.0
        %302 = vmatpush1.xpose.msra.mxu0 %v299
        %303 = vmatprep.subr.mxu0 0.0
        %304 = vmatpush1.xpose.msra.mxu0 0.0
        %305 = vmatprep.subr.mxu0 0.0
        %306 = vmatpush1.xpose.msra.mxu0 0.0
        %307 = vmatprep.subr.mxu0 0.0
        %308 = vmatpush1.xpose.msra.mxu0 0.0
        %309 = vmatprep.subr.mxu0 0.0
        %310 = vmatpush1.xpose.msra.mxu0 0.0
        %311 = vmatprep.subr.mxu0 0.0
        %312 = vmatpush1.xpose.msra.mxu0 0.0
        %313 = vmatprep.subr.mxu0 0.0
        %314 = vmatpush1.xpose.msra.mxu0 0.0
        %315 = vmatprep.subr.mxu0 0.0
        %316 = vmatpush1.xpose.msra.mxu0 0.0
        %317 = vmatprep.subr.mxu0 0.0
        %318 = vmatpush1.xpose.msra.mxu0 0.0
        %319 = vmatprep.subr.mxu0 0.0
        %320 = vmatpush1.xpose.msra.mxu0 0.0
        %321 = vmatprep.subr.mxu0 0.0
        %322 = vmatpush1.xpose.msra.mxu0 0.0
        %323 = vmatprep.subr.mxu0 0.0
        %324 = vmatpush1.xpose.msra.mxu0 0.0
        %325 = vmatprep.subr.mxu0 0.0
        %326 = vmatpush1.xpose.msra.mxu0 0.0
        %327 = vmatprep.subr.mxu0 0.0
        %328 = vmatpush1.xpose.msra.mxu0 0.0
        %329 = vmatprep.subr.mxu0 0.0
        %330 = vmatpush1.xpose.msra.mxu0 0.0
        %331 = vmatprep.subr.mxu0 0.0
        %332 = vmatpush1.xpose.msra.mxu0 0.0
        %333 = vmatprep.subr.mxu0 0.0
        %334 = vmatpush1.xpose.msra.mxu0 0.0
        %335 = vmatprep.subr.mxu0 0.0
        %336 = vmatpush1.xpose.msra.mxu0 0.0
        %337 = vmatprep.subr.mxu0 0.0
        %338 = vmatpush1.xpose.msra.mxu0 0.0
        %339 = vmatprep.subr.mxu0 0.0
        %340 = vmatpush1.xpose.msra.mxu0 0.0
        %341 = vmatprep.subr.mxu0 0.0
        %342 = vmatpush1.xpose.msra.mxu0 0.0
        %343 = vmatprep.subr.mxu0 0.0
        %344 = vmatpush1.xpose.msra.mxu0 0.0
        %345 = vmatprep.subr.mxu0 0.0
        %346 = vmatpush1.xpose.msra.mxu0 0.0
        %347 = vmatprep.subr.mxu0 0.0
        %348 = vmatpush1.xpose.msra.mxu0 0.0
        %349 = vmatprep.subr.mxu0 0.0
        %350 = vmatpush1.xpose.msra.mxu0 0.0
        %351 = vmatprep.subr.mxu0 0.0
        %352 = vmatpush1.xpose.msra.mxu0 0.0
        %353 = vmatprep.subr.mxu0 0.0
        %354 = vmatpush1.xpose.msra.mxu0 0.0
        %355 = vmatprep.subr.mxu0 0.0
        %356 = vmatpush1.xpose.msra.mxu0 0.0
        %357 = vmatprep.subr.mxu0 0.0
        %358 = vmatpush1.xpose.msra.mxu0 0.0
        %359 = vmatprep.subr.mxu0 0.0
        %360 = vmatpush1.xpose.msra.mxu0 0.0
        %361 = vmatprep.subr.mxu0 0.0
        %362 = vmatpush1.xpose.msra.mxu0 0.0
        %363 = vmatprep.subr.mxu0 0.0
        %364 = vmatpush1.xpose.msra.mxu0 0.0
        %365 = vmatprep.mubr.f32.mxu0 0.0
        %366 = vmatmul.mubr.f32.gmra.mrb[0].mxu0 %v297
        %v367 = vpop.f32.mrb[0].mxu0
        %v368 = vadd.f32 0.0, %v367
        %v369 = vpop.f32.mrb[0].mxu0
        %370 = vdwg.mxu0
        %v371 = vsel %vm295, %v368, -inf
        %372 = vmax.xlane.f32.xlu0 %v371
        %v373 = vpop.xlane.xlu0 %372
        %v374 = vsub.f32 %v368, %v373
        %v375 = vmul.f32 %v374, 1.442695
        %v376 = vpow.pop %v375
        %v377 = vsel %vm295, %v376, 0.0
        %378 = vadd.xlane.f32.xlu0 %v377
        %v379 = vpop.xlane.xlu0 %378
        %v380 = vrcp.pop %v379
        %v381 = vmul.f32 %v376, %v380
        %382 = vrot.lane.b32.xlu0 %v288, 64
        %v383 = vpop.permute.xlu0 %382
        %v386 = vsel %vm295, %v381, 0
        %388 = vmatprep.subr.mxu0 0.0
        %389 = vmatpush1.msra.mxu0 %v383
        %390 = vmatprep.subr.mxu0 0.0
        %391 = vmatpush1.msra.mxu0 0.0
        %392 = vmatprep.subr.mxu0 0.0
        %393 = vmatpush1.msra.mxu0 0.0
        %394 = vmatprep.subr.mxu0 0.0
        %395 = vmatpush1.msra.mxu0 0.0
        %396 = vmatprep.subr.mxu0 0.0
        %397 = vmatpush1.msra.mxu0 0.0
        %398 = vmatprep.subr.mxu0 0.0
        %399 = vmatpush1.msra.mxu0 0.0
        %400 = vmatprep.subr.mxu0 0.0
        %401 = vmatpush1.msra.mxu0 0.0
        %402 = vmatprep.subr.mxu0 0.0
        %403 = vmatpush1.msra.mxu0 0.0
        %404 = vmatprep.subr.mxu0 0.0
        %405 = vmatpush1.msra.mxu0 0.0
        %406 = vmatprep.subr.mxu0 0.0
        %407 = vmatpush1.msra.mxu0 0.0
        %408 = vmatprep.subr.mxu0 0.0
        %409 = vmatpush1.msra.mxu0 0.0
        %410 = vmatprep.subr.mxu0 0.0
        %411 = vmatpush1.msra.mxu0 0.0
        %412 = vmatprep.subr.mxu0 0.0
        %413 = vmatpush1.msra.mxu0 0.0
        %414 = vmatprep.subr.mxu0 0.0
        %415 = vmatpush1.msra.mxu0 0.0
        %416 = vmatprep.subr.mxu0 0.0
        %417 = vmatpush1.msra.mxu0 0.0
        %418 = vmatprep.subr.mxu0 0.0
        %419 = vmatpush1.msra.mxu0 0.0
        %420 = vmatprep.subr.mxu0 0.0
        %421 = vmatpush1.msra.mxu0 0.0
        %422 = vmatprep.subr.mxu0 0.0
        %423 = vmatpush1.msra.mxu0 0.0
        %424 = vmatprep.subr.mxu0 0.0
        %425 = vmatpush1.msra.mxu0 0.0
        %426 = vmatprep.subr.mxu0 0.0
        %427 = vmatpush1.msra.mxu0 0.0
        %428 = vmatprep.subr.mxu0 0.0
        %429 = vmatpush1.msra.mxu0 0.0
        %430 = vmatprep.subr.mxu0 0.0
        %431 = vmatpush1.msra.mxu0 0.0
        %432 = vmatprep.subr.mxu0 0.0
        %433 = vmatpush1.msra.mxu0 0.0
        %434 = vmatprep.subr.mxu0 0.0
        %435 = vmatpush1.msra.mxu0 0.0
        %436 = vmatprep.subr.mxu0 0.0
        %437 = vmatpush1.msra.mxu0 0.0
        %438 = vmatprep.subr.mxu0 0.0
        %439 = vmatpush1.msra.mxu0 0.0
        %440 = vmatprep.subr.mxu0 0.0
        %441 = vmatpush1.msra.mxu0 0.0
        %442 = vmatprep.subr.mxu0 0.0
        %443 = vmatpush1.msra.mxu0 0.0
        %444 = vmatprep.subr.mxu0 0.0
        %445 = vmatpush1.msra.mxu0 0.0
        %446 = vmatprep.subr.mxu0 0.0
        %447 = vmatpush1.msra.mxu0 0.0
        %448 = vmatprep.subr.mxu0 0.0
        %449 = vmatpush1.msra.mxu0 0.0
        %450 = vmatprep.subr.mxu0 0.0
        %451 = vmatpush1.msra.mxu0 0.0
        %452 = vmatprep.mubr.f32.mxu0 0.0
        %453 = vmatmul.mubr.f32.gmra.mrb[0].mxu0 %v386
        %v454 = vpop.f32.mrb[0].mxu0
        %v455 = vadd.f32 0.0, %v454
        %v456 = vpop.f32.mrb[0].mxu0
        %457 = vdwg.mxu0
        %458 = vst.msk [vmem:[%s211] sm:$0xff] %vm295, %v381
        %459 = vrot.lane.b32.xlu0 %v291, 120
        %v460 = vpop.permute.xlu0 %459
        %461 = vrot.lane.b32.xlu0 %v288, 88
        %v462 = vpop.permute.xlu0 %461
        %v463 = vsel %vm295, %v460, 0
        %v465 = vsel %vm295, %v462, 0
        %467 = vmatprep.subr.mxu0 0.0
        %468 = vmatpush1.xpose.msra.mxu0 %v465
        %469 = vmatprep.subr.mxu0 0.0
        %470 = vmatpush1.xpose.msra.mxu0 0.0
        %471 = vmatprep.subr.mxu0 0.0
        %472 = vmatpush1.xpose.msra.mxu0 0.0
        %473 = vmatprep.subr.mxu0 0.0
        %474 = vmatpush1.xpose.msra.mxu0 0.0
        %475 = vmatprep.subr.mxu0 0.0
        %476 = vmatpush1.xpose.msra.mxu0 0.0
        %477 = vmatprep.subr.mxu0 0.0
        %478 = vmatpush1.xpose.msra.mxu0 0.0
        %479 = vmatprep.subr.mxu0 0.0
        %480 = vmatpush1.xpose.msra.mxu0 0.0
        %481 = vmatprep.subr.mxu0 0.0
        %482 = vmatpush1.xpose.msra.mxu0 0.0
        %483 = vmatprep.subr.mxu0 0.0
        %484 = vmatpush1.xpose.msra.mxu0 0.0
        %485 = vmatprep.subr.mxu0 0.0
        %486 = vmatpush1.xpose.msra.mxu0 0.0
        %487 = vmatprep.subr.mxu0 0.0
        %488 = vmatpush1.xpose.msra.mxu0 0.0
        %489 = vmatprep.subr.mxu0 0.0
        %490 = vmatpush1.xpose.msra.mxu0 0.0
        %491 = vmatprep.subr.mxu0 0.0
        %492 = vmatpush1.xpose.msra.mxu0 0.0
        %493 = vmatprep.subr.mxu0 0.0
        %494 = vmatpush1.xpose.msra.mxu0 0.0
        %495 = vmatprep.subr.mxu0 0.0
        %496 = vmatpush1.xpose.msra.mxu0 0.0
        %497 = vmatprep.subr.mxu0 0.0
        %498 = vmatpush1.xpose.msra.mxu0 0.0
        %499 = vmatprep.subr.mxu0 0.0
        %500 = vmatpush1.xpose.msra.mxu0 0.0
        %501 = vmatprep.subr.mxu0 0.0
        %502 = vmatpush1.xpose.msra.mxu0 0.0
        %503 = vmatprep.subr.mxu0 0.0
        %504 = vmatpush1.xpose.msra.mxu0 0.0
        %505 = vmatprep.subr.mxu0 0.0
        %506 = vmatpush1.xpose.msra.mxu0 0.0
        %507 = vmatprep.subr.mxu0 0.0
        %508 = vmatpush1.xpose.msra.mxu0 0.0
        %509 = vmatprep.subr.mxu0 0.0
        %510 = vmatpush1.xpose.msra.mxu0 0.0
        %511 = vmatprep.subr.mxu0 0.0
        %512 = vmatpush1.xpose.msra.mxu0 0.0
        %513 = vmatprep.subr.mxu0 0.0
        %514 = vmatpush1.xpose.msra.mxu0 0.0
        %515 = vmatprep.subr.mxu0 0.0
        %516 = vmatpush1.xpose.msra.mxu0 0.0
        %517 = vmatprep.subr.mxu0 0.0
        %518 = vmatpush1.xpose.msra.mxu0 0.0
        %519 = vmatprep.subr.mxu0 0.0
        %520 = vmatpush1.xpose.msra.mxu0 0.0
        %521 = vmatprep.subr.mxu0 0.0
        %522 = vmatpush1.xpose.msra.mxu0 0.0
        %523 = vmatprep.subr.mxu0 0.0
        %524 = vmatpush1.xpose.msra.mxu0 0.0
        %525 = vmatprep.subr.mxu0 0.0
        %526 = vmatpush1.xpose.msra.mxu0 0.0
        %527 = vmatprep.subr.mxu0 0.0
        %528 = vmatpush1.xpose.msra.mxu0 0.0
        %529 = vmatprep.subr.mxu0 0.0
        %530 = vmatpush1.xpose.msra.mxu0 0.0
        %531 = vmatprep.mubr.f32.mxu0 0.0
        %532 = vmatmul.mubr.f32.gmra.mrb[0].mxu0 %v463
        %v533 = vpop.f32.mrb[0].mxu0
        %v534 = vadd.f32 0.0, %v533
        %v535 = vpop.f32.mrb[0].mxu0
        %536 = vdwg.mxu0
        %v537 = vsel %vm295, %v534, -inf
        %538 = vmax.xlane.f32.xlu0 %v537
        %v539 = vpop.xlane.xlu0 %538
        %v540 = vsub.f32 %v534, %v539
        %v541 = vmul.f32 %v540, 1.442695
        %v542 = vpow.pop %v541
        %v543 = vsel %vm295, %v542, 0.0
        %544 = vadd.xlane.f32.xlu0 %v543
        %v545 = vpop.xlane.xlu0 %544
        %v546 = vrcp.pop %v545
        %v547 = vmul.f32 %v542, %v546
        %548 = vrot.lane.b32.xlu0 %v288, 56
        %v549 = vpop.permute.xlu0 %548
        %v552 = vsel %vm295, %v547, 0
        %554 = vmatprep.subr.mxu0 0.0
        %555 = vmatpush1.msra.mxu0 %v549
        %556 = vmatprep.subr.mxu0 0.0
        %557 = vmatpush1.msra.mxu0 0.0
        %558 = vmatprep.subr.mxu0 0.0
        %559 = vmatpush1.msra.mxu0 0.0
        %560 = vmatprep.subr.mxu0 0.0
        %561 = vmatpush1.msra.mxu0 0.0
        %562 = vmatprep.subr.mxu0 0.0
        %563 = vmatpush1.msra.mxu0 0.0
        %564 = vmatprep.subr.mxu0 0.0
        %565 = vmatpush1.msra.mxu0 0.0
        %566 = vmatprep.subr.mxu0 0.0
        %567 = vmatpush1.msra.mxu0 0.0
        %568 = vmatprep.subr.mxu0 0.0
        %569 = vmatpush1.msra.mxu0 0.0
        %570 = vmatprep.subr.mxu0 0.0
        %571 = vmatpush1.msra.mxu0 0.0
        %572 = vmatprep.subr.mxu0 0.0
        %573 = vmatpush1.msra.mxu0 0.0
        %574 = vmatprep.subr.mxu0 0.0
        %575 = vmatpush1.msra.mxu0 0.0
        %576 = vmatprep.subr.mxu0 0.0
        %577 = vmatpush1.msra.mxu0 0.0
        %578 = vmatprep.subr.mxu0 0.0
        %579 = vmatpush1.msra.mxu0 0.0
        %580 = vmatprep.subr.mxu0 0.0
        %581 = vmatpush1.msra.mxu0 0.0
        %582 = vmatprep.subr.mxu0 0.0
        %583 = vmatpush1.msra.mxu0 0.0
        %584 = vmatprep.subr.mxu0 0.0
        %585 = vmatpush1.msra.mxu0 0.0
        %586 = vmatprep.subr.mxu0 0.0
        %587 = vmatpush1.msra.mxu0 0.0
        %588 = vmatprep.subr.mxu0 0.0
        %589 = vmatpush1.msra.mxu0 0.0
        %590 = vmatprep.subr.mxu0 0.0
        %591 = vmatpush1.msra.mxu0 0.0
        %592 = vmatprep.subr.mxu0 0.0
        %593 = vmatpush1.msra.mxu0 0.0
        %594 = vmatprep.subr.mxu0 0.0
        %595 = vmatpush1.msra.mxu0 0.0
        %596 = vmatprep.subr.mxu0 0.0
        %597 = vmatpush1.msra.mxu0 0.0
        %598 = vmatprep.subr.mxu0 0.0
        %599 = vmatpush1.msra.mxu0 0.0
        %600 = vmatprep.subr.mxu0 0.0
        %601 = vmatpush1.msra.mxu0 0.0
        %602 = vmatprep.subr.mxu0 0.0
        %603 = vmatpush1.msra.mxu0 0.0
        %604 = vmatprep.subr.mxu0 0.0
        %605 = vmatpush1.msra.mxu0 0.0
        %606 = vmatprep.subr.mxu0 0.0
        %607 = vmatpush1.msra.mxu0 0.0
        %608 = vmatprep.subr.mxu0 0.0
        %609 = vmatpush1.msra.mxu0 0.0
        %610 = vmatprep.subr.mxu0 0.0
        %611 = vmatpush1.msra.mxu0 0.0
        %612 = vmatprep.subr.mxu0 0.0
        %613 = vmatpush1.msra.mxu0 0.0
        %614 = vmatprep.subr.mxu0 0.0
        %615 = vmatpush1.msra.mxu0 0.0
        %616 = vmatprep.subr.mxu0 0.0
        %617 = vmatpush1.msra.mxu0 0.0
        %618 = vmatprep.mubr.f32.mxu0 0.0
        %619 = vmatmul.mubr.f32.gmra.mrb[0].mxu0 %v552
        %v620 = vpop.f32.mrb[0].mxu0
        %v621 = vadd.f32 0.0, %v620
        %v622 = vpop.f32.mrb[0].mxu0
        %623 = vdwg.mxu0
        %s624 = scalar_lea.vmem %s211, 8 [#allocation8]
        %625 = vst.msk [vmem:[%s624] sm:$0xff] %vm295, %v547
        %626 = vrot.lane.b32.xlu0 %v291, 112
        %v627 = vpop.permute.xlu0 %626
        %628 = vrot.lane.b32.xlu0 %v288, 80
        %v629 = vpop.permute.xlu0 %628
        %v630 = vsel %vm295, %v627, 0
        %v632 = vsel %vm295, %v629, 0
        %634 = vmatprep.subr.mxu0 0.0
        %635 = vmatpush1.xpose.msra.mxu0 %v632
        %636 = vmatprep.subr.mxu0 0.0
        %637 = vmatpush1.xpose.msra.mxu0 0.0
        %638 = vmatprep.subr.mxu0 0.0
        %639 = vmatpush1.xpose.msra.mxu0 0.0
        %640 = vmatprep.subr.mxu0 0.0
        %641 = vmatpush1.xpose.msra.mxu0 0.0
        %642 = vmatprep.subr.mxu0 0.0
        %643 = vmatpush1.xpose.msra.mxu0 0.0
        %644 = vmatprep.subr.mxu0 0.0
        %645 = vmatpush1.xpose.msra.mxu0 0.0
        %646 = vmatprep.subr.mxu0 0.0
        %647 = vmatpush1.xpose.msra.mxu0 0.0
        %648 = vmatprep.subr.mxu0 0.0
        %649 = vmatpush1.xpose.msra.mxu0 0.0
        %650 = vmatprep.subr.mxu0 0.0
        %651 = vmatpush1.xpose.msra.mxu0 0.0
        %652 = vmatprep.subr.mxu0 0.0
        %653 = vmatpush1.xpose.msra.mxu0 0.0
        %654 = vmatprep.subr.mxu0 0.0
        %655 = vmatpush1.xpose.msra.mxu0 0.0
        %656 = vmatprep.subr.mxu0 0.0
        %657 = vmatpush1.xpose.msra.mxu0 0.0
        %658 = vmatprep.subr.mxu0 0.0
        %659 = vmatpush1.xpose.msra.mxu0 0.0
        %660 = vmatprep.subr.mxu0 0.0
        %661 = vmatpush1.xpose.msra.mxu0 0.0
        %662 = vmatprep.subr.mxu0 0.0
        %663 = vmatpush1.xpose.msra.mxu0 0.0
        %664 = vmatprep.subr.mxu0 0.0
        %665 = vmatpush1.xpose.msra.mxu0 0.0
        %666 = vmatprep.subr.mxu0 0.0
        %667 = vmatpush1.xpose.msra.mxu0 0.0
        %668 = vmatprep.subr.mxu0 0.0
        %669 = vmatpush1.xpose.msra.mxu0 0.0
        %670 = vmatprep.subr.mxu0 0.0
        %671 = vmatpush1.xpose.msra.mxu0 0.0
        %672 = vmatprep.subr.mxu0 0.0
        %673 = vmatpush1.xpose.msra.mxu0 0.0
        %674 = vmatprep.subr.mxu0 0.0
        %675 = vmatpush1.xpose.msra.mxu0 0.0
        %676 = vmatprep.subr.mxu0 0.0
        %677 = vmatpush1.xpose.msra.mxu0 0.0
        %678 = vmatprep.subr.mxu0 0.0
        %679 = vmatpush1.xpose.msra.mxu0 0.0
        %680 = vmatprep.subr.mxu0 0.0
        %681 = vmatpush1.xpose.msra.mxu0 0.0
        %682 = vmatprep.subr.mxu0 0.0
        %683 = vmatpush1.xpose.msra.mxu0 0.0
        %684 = vmatprep.subr.mxu0 0.0
        %685 = vmatpush1.xpose.msra.mxu0 0.0
        %686 = vmatprep.subr.mxu0 0.0
        %687 = vmatpush1.xpose.msra.mxu0 0.0
        %688 = vmatprep.subr.mxu0 0.0
        %689 = vmatpush1.xpose.msra.mxu0 0.0
        %690 = vmatprep.subr.mxu0 0.0
        %691 = vmatpush1.xpose.msra.mxu0 0.0
        %692 = vmatprep.subr.mxu0 0.0
        %693 = vmatpush1.xpose.msra.mxu0 0.0
        %694 = vmatprep.subr.mxu0 0.0
        %695 = vmatpush1.xpose.msra.mxu0 0.0
        %696 = vmatprep.subr.mxu0 0.0
        %697 = vmatpush1.xpose.msra.mxu0 0.0
        %698 = vmatprep.mubr.f32.mxu0 0.0
        %699 = vmatmul.mubr.f32.gmra.mrb[0].mxu0 %v630
        %v700 = vpop.f32.mrb[0].mxu0
        %v701 = vadd.f32 0.0, %v700
        %v702 = vpop.f32.mrb[0].mxu0
        %703 = vdwg.mxu0
        %v704 = vsel %vm295, %v701, -inf
        %705 = vmax.xlane.f32.xlu0 %v704
        %v706 = vpop.xlane.xlu0 %705
        %v707 = vsub.f32 %v701, %v706
        %v708 = vmul.f32 %v707, 1.442695
        %v709 = vpow.pop %v708
        %v710 = vsel %vm295, %v709, 0.0
        %711 = vadd.xlane.f32.xlu0 %v710
        %v712 = vpop.xlane.xlu0 %711
        %v713 = vrcp.pop %v712
        %v714 = vmul.f32 %v709, %v713
        %715 = vrot.lane.b32.xlu0 %v288, 48
        %v716 = vpop.permute.xlu0 %715
        %v719 = vsel %vm295, %v714, 0
        %721 = vmatprep.subr.mxu0 0.0
        %722 = vmatpush1.msra.mxu0 %v716
        %723 = vmatprep.subr.mxu0 0.0
        %724 = vmatpush1.msra.mxu0 0.0
        %725 = vmatprep.subr.mxu0 0.0
        %726 = vmatpush1.msra.mxu0 0.0
        %727 = vmatprep.subr.mxu0 0.0
        %728 = vmatpush1.msra.mxu0 0.0
        %729 = vmatprep.subr.mxu0 0.0
        %730 = vmatpush1.msra.mxu0 0.0
        %731 = vmatprep.subr.mxu0 0.0
        %732 = vmatpush1.msra.mxu0 0.0
        %733 = vmatprep.subr.mxu0 0.0
        %734 = vmatpush1.msra.mxu0 0.0
        %735 = vmatprep.subr.mxu0 0.0
        %736 = vmatpush1.msra.mxu0 0.0
        %737 = vmatprep.subr.mxu0 0.0
        %738 = vmatpush1.msra.mxu0 0.0
        %739 = vmatprep.subr.mxu0 0.0
        %740 = vmatpush1.msra.mxu0 0.0
        %741 = vmatprep.subr.mxu0 0.0
        %742 = vmatpush1.msra.mxu0 0.0
        %743 = vmatprep.subr.mxu0 0.0
        %744 = vmatpush1.msra.mxu0 0.0
        %745 = vmatprep.subr.mxu0 0.0
        %746 = vmatpush1.msra.mxu0 0.0
        %747 = vmatprep.subr.mxu0 0.0
        %748 = vmatpush1.msra.mxu0 0.0
        %749 = vmatprep.subr.mxu0 0.0
        %750 = vmatpush1.msra.mxu0 0.0
        %751 = vmatprep.subr.mxu0 0.0
        %752 = vmatpush1.msra.mxu0 0.0
        %753 = vmatprep.subr.mxu0 0.0
        %754 = vmatpush1.msra.mxu0 0.0
        %755 = vmatprep.subr.mxu0 0.0
        %756 = vmatpush1.msra.mxu0 0.0
        %757 = vmatprep.subr.mxu0 0.0
        %758 = vmatpush1.msra.mxu0 0.0
        %759 = vmatprep.subr.mxu0 0.0
        %760 = vmatpush1.msra.mxu0 0.0
        %761 = vmatprep.subr.mxu0 0.0
        %762 = vmatpush1.msra.mxu0 0.0
        %763 = vmatprep.subr.mxu0 0.0
        %764 = vmatpush1.msra.mxu0 0.0
        %765 = vmatprep.subr.mxu0 0.0
        %766 = vmatpush1.msra.mxu0 0.0
        %767 = vmatprep.subr.mxu0 0.0
        %768 = vmatpush1.msra.mxu0 0.0
        %769 = vmatprep.subr.mxu0 0.0
        %770 = vmatpush1.msra.mxu0 0.0
        %771 = vmatprep.subr.mxu0 0.0
        %772 = vmatpush1.msra.mxu0 0.0
        %773 = vmatprep.subr.mxu0 0.0
        %774 = vmatpush1.msra.mxu0 0.0
        %775 = vmatprep.subr.mxu0 0.0
        %776 = vmatpush1.msra.mxu0 0.0
        %777 = vmatprep.subr.mxu0 0.0
        %778 = vmatpush1.msra.mxu0 0.0
        %779 = vmatprep.subr.mxu0 0.0
        %780 = vmatpush1.msra.mxu0 0.0
        %781 = vmatprep.subr.mxu0 0.0
        %782 = vmatpush1.msra.mxu0 0.0
        %783 = vmatprep.subr.mxu0 0.0
        %784 = vmatpush1.msra.mxu0 0.0
        %785 = vmatprep.mubr.f32.mxu0 0.0
        %786 = vmatmul.mubr.f32.gmra.mrb[0].mxu0 %v719
        %v787 = vpop.f32.mrb[0].mxu0
        %v788 = vadd.f32 0.0, %v787
        %v789 = vpop.f32.mrb[0].mxu0
        %790 = vdwg.mxu0
        %s791 = scalar_lea.vmem %s211, 16 [#allocation8]
        %792 = vst.msk [vmem:[%s791] sm:$0xff] %vm295, %v714
        %793 = vrot.lane.b32.xlu0 %v291, 104
        %v794 = vpop.permute.xlu0 %793
        %795 = vrot.lane.b32.xlu0 %v288, 72
        %v796 = vpop.permute.xlu0 %795
        %v797 = vsel %vm295, %v794, 0
        %v799 = vsel %vm295, %v796, 0
        %801 = vmatprep.subr.mxu0 0.0
        %802 = vmatpush1.xpose.msra.mxu0 %v799
        %803 = vmatprep.subr.mxu0 0.0
        %804 = vmatpush1.xpose.msra.mxu0 0.0
        %805 = vmatprep.subr.mxu0 0.0
        %806 = vmatpush1.xpose.msra.mxu0 0.0
        %807 = vmatprep.subr.mxu0 0.0
        %808 = vmatpush1.xpose.msra.mxu0 0.0
        %809 = vmatprep.subr.mxu0 0.0
        %810 = vmatpush1.xpose.msra.mxu0 0.0
        %811 = vmatprep.subr.mxu0 0.0
        %812 = vmatpush1.xpose.msra.mxu0 0.0
        %813 = vmatprep.subr.mxu0 0.0
        %814 = vmatpush1.xpose.msra.mxu0 0.0
        %815 = vmatprep.subr.mxu0 0.0
        %816 = vmatpush1.xpose.msra.mxu0 0.0
        %817 = vmatprep.subr.mxu0 0.0
        %818 = vmatpush1.xpose.msra.mxu0 0.0
        %819 = vmatprep.subr.mxu0 0.0
        %820 = vmatpush1.xpose.msra.mxu0 0.0
        %821 = vmatprep.subr.mxu0 0.0
        %822 = vmatpush1.xpose.msra.mxu0 0.0
        %823 = vmatprep.subr.mxu0 0.0
        %824 = vmatpush1.xpose.msra.mxu0 0.0
        %825 = vmatprep.subr.mxu0 0.0
        %826 = vmatpush1.xpose.msra.mxu0 0.0
        %827 = vmatprep.subr.mxu0 0.0
        %828 = vmatpush1.xpose.msra.mxu0 0.0
        %829 = vmatprep.subr.mxu0 0.0
        %830 = vmatpush1.xpose.msra.mxu0 0.0
        %831 = vmatprep.subr.mxu0 0.0
        %832 = vmatpush1.xpose.msra.mxu0 0.0
        %833 = vmatprep.subr.mxu0 0.0
        %834 = vmatpush1.xpose.msra.mxu0 0.0
        %835 = vmatprep.subr.mxu0 0.0
        %836 = vmatpush1.xpose.msra.mxu0 0.0
        %837 = vmatprep.subr.mxu0 0.0
        %838 = vmatpush1.xpose.msra.mxu0 0.0
        %839 = vmatprep.subr.mxu0 0.0
        %840 = vmatpush1.xpose.msra.mxu0 0.0
        %841 = vmatprep.subr.mxu0 0.0
        %842 = vmatpush1.xpose.msra.mxu0 0.0
        %843 = vmatprep.subr.mxu0 0.0
        %844 = vmatpush1.xpose.msra.mxu0 0.0
        %845 = vmatprep.subr.mxu0 0.0
        %846 = vmatpush1.xpose.msra.mxu0 0.0
        %847 = vmatprep.subr.mxu0 0.0
        %848 = vmatpush1.xpose.msra.mxu0 0.0
        %849 = vmatprep.subr.mxu0 0.0
        %850 = vmatpush1.xpose.msra.mxu0 0.0
        %851 = vmatprep.subr.mxu0 0.0
        %852 = vmatpush1.xpose.msra.mxu0 0.0
        %853 = vmatprep.subr.mxu0 0.0
        %854 = vmatpush1.xpose.msra.mxu0 0.0
        %855 = vmatprep.subr.mxu0 0.0
        %856 = vmatpush1.xpose.msra.mxu0 0.0
        %857 = vmatprep.subr.mxu0 0.0
        %858 = vmatpush1.xpose.msra.mxu0 0.0
        %859 = vmatprep.subr.mxu0 0.0
        %860 = vmatpush1.xpose.msra.mxu0 0.0
        %861 = vmatprep.subr.mxu0 0.0
        %862 = vmatpush1.xpose.msra.mxu0 0.0
        %863 = vmatprep.subr.mxu0 0.0
        %864 = vmatpush1.xpose.msra.mxu0 0.0
        %865 = vmatprep.mubr.f32.mxu0 0.0
        %866 = vmatmul.mubr.f32.gmra.mrb[0].mxu0 %v797
        %v867 = vpop.f32.mrb[0].mxu0
        %v868 = vadd.f32 0.0, %v867
        %v869 = vpop.f32.mrb[0].mxu0
        %870 = vdwg.mxu0
        %v871 = vsel %vm295, %v868, -inf
        %872 = vmax.xlane.f32.xlu0 %v871
        %v873 = vpop.xlane.xlu0 %872
        %v874 = vsub.f32 %v868, %v873
        %v875 = vmul.f32 %v874, 1.442695
        %v876 = vpow.pop %v875
        %v877 = vsel %vm295, %v876, 0.0
        %878 = vadd.xlane.f32.xlu0 %v877
        %v879 = vpop.xlane.xlu0 %878
        %v880 = vrcp.pop %v879
        %v881 = vmul.f32 %v876, %v880
        %882 = vrot.lane.b32.xlu0 %v288, 40
        %v883 = vpop.permute.xlu0 %882
        %v886 = vsel %vm295, %v881, 0
        %888 = vmatprep.subr.mxu0 0.0
        %889 = vmatpush1.msra.mxu0 %v883
        %890 = vmatprep.subr.mxu0 0.0
        %891 = vmatpush1.msra.mxu0 0.0
        %892 = vmatprep.subr.mxu0 0.0
        %893 = vmatpush1.msra.mxu0 0.0
        %894 = vmatprep.subr.mxu0 0.0
        %895 = vmatpush1.msra.mxu0 0.0
        %896 = vmatprep.subr.mxu0 0.0
        %897 = vmatpush1.msra.mxu0 0.0
        %898 = vmatprep.subr.mxu0 0.0
        %899 = vmatpush1.msra.mxu0 0.0
        %900 = vmatprep.subr.mxu0 0.0
        %901 = vmatpush1.msra.mxu0 0.0
        %902 = vmatprep.subr.mxu0 0.0
        %903 = vmatpush1.msra.mxu0 0.0
        %904 = vmatprep.subr.mxu0 0.0
        %905 = vmatpush1.msra.mxu0 0.0
        %906 = vmatprep.subr.mxu0 0.0
        %907 = vmatpush1.msra.mxu0 0.0
        %908 = vmatprep.subr.mxu0 0.0
        %909 = vmatpush1.msra.mxu0 0.0
        %910 = vmatprep.subr.mxu0 0.0
        %911 = vmatpush1.msra.mxu0 0.0
        %912 = vmatprep.subr.mxu0 0.0
        %913 = vmatpush1.msra.mxu0 0.0
        %914 = vmatprep.subr.mxu0 0.0
        %915 = vmatpush1.msra.mxu0 0.0
        %916 = vmatprep.subr.mxu0 0.0
        %917 = vmatpush1.msra.mxu0 0.0
        %918 = vmatprep.subr.mxu0 0.0
        %919 = vmatpush1.msra.mxu0 0.0
        %920 = vmatprep.subr.mxu0 0.0
        %921 = vmatpush1.msra.mxu0 0.0
        %922 = vmatprep.subr.mxu0 0.0
        %923 = vmatpush1.msra.mxu0 0.0
        %924 = vmatprep.subr.mxu0 0.0
        %925 = vmatpush1.msra.mxu0 0.0
        %926 = vmatprep.subr.mxu0 0.0
        %927 = vmatpush1.msra.mxu0 0.0
        %928 = vmatprep.subr.mxu0 0.0
        %929 = vmatpush1.msra.mxu0 0.0
        %930 = vmatprep.subr.mxu0 0.0
        %931 = vmatpush1.msra.mxu0 0.0
        %932 = vmatprep.subr.mxu0 0.0
        %933 = vmatpush1.msra.mxu0 0.0
        %934 = vmatprep.subr.mxu0 0.0
        %935 = vmatpush1.msra.mxu0 0.0
        %936 = vmatprep.subr.mxu0 0.0
        %937 = vmatpush1.msra.mxu0 0.0
        %938 = vmatprep.subr.mxu0 0.0
        %939 = vmatpush1.msra.mxu0 0.0
        %940 = vmatprep.subr.mxu0 0.0
        %941 = vmatpush1.msra.mxu0 0.0
        %942 = vmatprep.subr.mxu0 0.0
        %943 = vmatpush1.msra.mxu0 0.0
        %944 = vmatprep.subr.mxu0 0.0
        %945 = vmatpush1.msra.mxu0 0.0
        %946 = vmatprep.subr.mxu0 0.0
        %947 = vmatpush1.msra.mxu0 0.0
        %948 = vmatprep.subr.mxu0 0.0
        %949 = vmatpush1.msra.mxu0 0.0
        %950 = vmatprep.subr.mxu0 0.0
        %951 = vmatpush1.msra.mxu0 0.0
        %952 = vmatprep.mubr.f32.mxu0 0.0
        %953 = vmatmul.mubr.f32.gmra.mrb[0].mxu0 %v886
        %v954 = vpop.f32.mrb[0].mxu0
        %v955 = vadd.f32 0.0, %v954
        %v956 = vpop.f32.mrb[0].mxu0
        %957 = vdwg.mxu0
        %s958 = scalar_lea.vmem %s211, 24 [#allocation8]
        %959 = vst.msk [vmem:[%s958] sm:$0xff] %vm295, %v881
        %961 = vrot.lane.b32.xlu0 %v621, 8
        %v962 = vpop.permute.xlu0 %961
        %965 = vrot.lane.b32.xlu0 %v788, 16
        %v966 = vpop.permute.xlu0 %965
        %969 = vrot.lane.b32.xlu0 %v955, 24
        %v970 = vpop.permute.xlu0 %969
        %v972 = vsel %vm295, %v455, %v962
        %vm973 = vcmask 130048
        %v974 = vsel %vm973, %v972, %v966
        %vm975 = vcmask 195584
        %v976 = vsel %vm975, %v974, %v970
        %977 = vst.msk [vmem:[%s204] sm:$0xff] %vm217, %v976
        %s978 = sand.u32 %s80, 1
        %s979 = scalar_lea.sflag [#allocation4], %s978
        %s980 = sand.u32 %s80, 1
        %s981 = smul.addr %s980, 8
        %s982 = scalar_lea.vmem [#allocation7], %s981
        %s983 = sand.u32 %s106, 1
        %s984 = scalar_lea.sflag [#allocation9], %s983
        %s985 = sand.u32 %s106, 1
        %s986 = smul.addr %s985, 32
        %s987 = scalar_lea.vmem [#allocation8], %s986
        // Predicated region
        $region37: #{tpu_custom_call.1} parent=27 // pred_check
          %p988 = pneg %p90
        $region38: #{tpu_custom_call.1} parent=27 // pred_check_branch
          %990 = sbr.rel (%p988) target = $region40
        $region39: #{tpu_custom_call.1} parent=27 // pred_region
          %s992 = ssub.s32 128, 128
          %993 = vsyncadd %s979, %s992
          %s994 = smul.addr %s25, 128
          %s995 = scalar_lea.hbm %s2, %s994
          %s997 = sshll.u32 %s982, 4
          %s998 = int_to_ptr.vmem [resolvable:$true] %s997
          %1000 = dma.vmem_to_hbm [thread:$0]  %s998, 128, %s995, %s979
        $region40: #{tpu_custom_call.1} parent=27 // pred_fallthru
          _
        // Predicated region
        $region41: #{tpu_custom_call.1} parent=27 // pred_check
          %p1001 = pneg %p116
        $region42: #{tpu_custom_call.1} parent=27 // pred_check_branch
          %1003 = sbr.rel (%p1001) target = $region44
        $region43: #{tpu_custom_call.1} parent=27 // pred_region
          %s1005 = ssub.s32 512, 512
          %1006 = vsyncadd %s984, %s1005
          %s1007 = smul.addr %s25, 4
          %s1008 = smul.addr %s1007, 128
          %s1009 = scalar_lea.hbm %s3, %s1008
          %s1010 = sshll.u32 %s987, 4
          %s1011 = int_to_ptr.vmem [resolvable:$true] %s1010
          %1016 = dma.vmem_to_hbm [thread:$0]  %s1011, 512, %s1009, %s984, 128, 128, 8
        $region44: #{tpu_custom_call.1} parent=27 // pred_fallthru
          _
      $region28: #{tpu_custom_call.1} parent=5 // pred_fallthru
        _
      %p1017 = scmp.le.s32.totalorder 2, %s20
      // Predicated region
      $region45: #{tpu_custom_call.1} parent=5 // pred_check
        %p1018 = pneg %p1017
      $region46: #{tpu_custom_call.1} parent=5 // pred_check_branch
        %1020 = sbr.rel (%p1018) target = $region48
      $region47: #{tpu_custom_call.1} parent=5 // pred_region
        %s1021 = ssub.s32 %s20, 2
        // Predicated region
        $region49: #{tpu_custom_call.1} parent=47 // pred_check
          %p1022 = pneg %p96
        $region50: #{tpu_custom_call.1} parent=47 // pred_check_branch
          %1024 = sbr.rel (%p1022) target = $region52
        $region51: #{tpu_custom_call.1} parent=47 // pred_region
          %s1025 = sand.u32 %s81, 1
          %s1026 = scalar_lea.sflag [#allocation4], %s1025
          %s1027 = sand.u32 %s81, 1
          %s1028 = smul.addr %s1027, 8
          %s1029 = scalar_lea.vmem [#allocation7], %s1028
          %1030 = dma.done %s1026, 128
        $region52: #{tpu_custom_call.1} parent=47 // pred_fallthru
          _
        // Predicated region
        $region53: #{tpu_custom_call.1} parent=47 // pred_check
          %p1031 = pneg %p122
        $region54: #{tpu_custom_call.1} parent=47 // pred_check_branch
          %1033 = sbr.rel (%p1031) target = $region56
        $region55: #{tpu_custom_call.1} parent=47 // pred_region
          %s1034 = sand.u32 %s107, 1
          %s1035 = scalar_lea.sflag [#allocation9], %s1034
          %s1036 = sand.u32 %s107, 1
          %s1037 = smul.addr %s1036, 32
          %s1038 = scalar_lea.vmem [#allocation8], %s1037
          %1039 = dma.done %s1035, 512
        $region56: #{tpu_custom_call.1} parent=47 // pred_fallthru
          _
      $region48: #{tpu_custom_call.1} parent=5 // pred_fallthru
        _
    $region6: #{tpu_custom_call.1} parent=1 // loop_footer
      %s24 = sadd.s32 1, %s20
    $region7: #{tpu_custom_call.1} parent=1 // loop_footer_branch
      %19 = sbr.rel target = $region3
    $region8: #{tpu_custom_call.1} parent=1 // loop_exit
      _
    %1040 = vsyncpa [#allocation3], 1
    %s1041 = scalar_lea.sflag [#allocation3], 1
    %1042 = vsyncpa %s1041, 1
    %1043 = vsyncpa [#allocation6], 1
    %1044 = vsyncpa [#allocation4], 1
    %s1045 = scalar_lea.sflag [#allocation4], 1
    %1046 = vsyncpa %s1045, 1
    %1047 = vsyncpa [#allocation9], 1
    %s1048 = scalar_lea.sflag [#allocation9], 1
    %1049 = vsyncpa %s1048, 1

</llo_original>
